<compile_context>
chip_gen: v7x
topology: tpu7x:2x2x1
jax: 0.10.0
libtpu: 0.0.40
codegen_flags: <defaults>
</compile_context>

<pallas_src>
import functools
import math

import jax
import jax.numpy as jnp
import numpy as np
from jax.experimental import pallas as pl
from jax.experimental.pallas import tpu as pltpu


def _aaca_hparams(channel, gamma=2, q=1, lamda=2, m=1):
    t = int(abs((math.log(channel, 2) + q) / gamma))
    k = t if t % 2 else t - 1
    k = max(k, 1)  # guard: tiny channel counts give k <= 0 (PyTorch itself would error)
    r = int((k + m) / lamda)
    pad = int((k - 1) * r / 2)
    return k, r, pad


def _round_up(x, m):
    return ((x + m - 1) // m) * m


def _vmem_capacity_bytes():
    try:
        return int(pltpu.get_tpu_info().vmem_capacity_bytes)
    except Exception:
        return 64 << 20  # conservative fallback (v7x per-TensorCore VMEM)


def _dilated_conv1d_taps(y, w_ref, *, k, dilation, pad, channels):
    """z[:, i] = sum_j w[j] * y[:, i + j*dilation - pad], zero outside [0, channels).

    y: (Bb, C) f32 with channels on the lane axis.  w_ref: (k,) f32 in SMEM.
    k shifted FMAs (VPU) + lane rotations (XLU) — no MXU, no dense (C,C) weights.
    """
    cidx = jax.lax.broadcasted_iota(jnp.int32, y.shape, 1)
    z = jnp.zeros_like(y)
    for j in range(k):
        off = j * dilation - pad  # static Python int
        if off == 0:
            tap = y
        else:
            rolled = pltpu.roll(y, shift=(-off) % channels, axis=1)  # rolled[i] = y[i + off]
            src = cidx + off
            tap = jnp.where((src >= 0) & (src < channels), rolled, 0.0)
        z = z + w_ref[j] * tap
    return z


def _conv_sigmoid_scale(y, w1_ref, w2_ref, *, k, dilation, pad):
    """conv -> relu -> conv -> sigmoid on the pooled (Bb, C) f32 vector; returns 1 + s (f32)."""
    C = y.shape[-1]
    z = _dilated_conv1d_taps(y, w1_ref, k=k, dilation=dilation, pad=pad, channels=C)
    z = jnp.maximum(z, 0.0)
    z = _dilated_conv1d_taps(z, w2_ref, k=k, dilation=dilation, pad=pad, channels=C)
    return 1.0 + jax.nn.sigmoid(z)


# ---------------------------------------------------------------------------
# Fused single-kernel path (one (Bb, C, HW_pad) slab per grid step).
# ---------------------------------------------------------------------------
def _fused_kernel(w1_ref, w2_ref, x_ref, o_ref, *, k, dilation, pad, true_hw):
    # Pool directly from the ref (f32 accumulation); do NOT keep the tile live across it.
    y = jnp.sum(x_ref[...], axis=2, dtype=jnp.float32) * (1.0 / true_hw)     # (Bb, C)
    scale = _conv_sigmoid_scale(y, w1_ref, w2_ref, k=k, dilation=dilation, pad=pad)
    # Re-read the ref for the scaled store; multiply in f32, cast once at the store.
    o_ref[...] = (x_ref[...].astype(jnp.float32) * scale[:, :, None]).astype(o_ref.dtype)


# ---------------------------------------------------------------------------
# Two-kernel split path for large spatial slabs (HW-tiled).
# ---------------------------------------------------------------------------
def _pool_scale_kernel(w1_ref, w2_ref, x_ref, scale_ref, acc_ref, *, k, dilation, pad, true_hw):
    hwi = pl.program_id(1)

    @pl.when(hwi == 0)
    def _():
        acc_ref[...] = jnp.zeros_like(acc_ref)

    acc_ref[...] += jnp.sum(x_ref[...], axis=2, dtype=jnp.float32)           # (1, C) partial sum

    @pl.when(hwi == pl.num_programs(1) - 1)
    def _():
        scale_ref[...] = _conv_sigmoid_scale(acc_ref[...] * (1.0 / true_hw),
                                             w1_ref, w2_ref,
                                             k=k, dilation=dilation, pad=pad)


def _apply_scale_kernel(scale_ref, x_ref, o_ref):
    o_ref[...] = (x_ref[...].astype(jnp.float32)
                  * scale_ref[...][:, :, None]).astype(o_ref.dtype)


# ---------------------------------------------------------------------------
# Wrapper
# ---------------------------------------------------------------------------
def channel_attention_pallas(x, w1, w2, dilation, pad, *, force_split=False, hw_tile=None):
    """out = x + x * sigmoid(conv1d(relu(conv1d(avgpool(x)))));  x: (B, C, H, W)."""
    B, C, H, W = x.shape
    HW = H * W
    k = int(w1.shape[0])
    itemsize = jnp.dtype(x.dtype).itemsize

    vmem_cap = _vmem_capacity_bytes()
    vmem_cap_limit = int(0.72 * vmem_cap)            # never request more than physical VMEM allows
    block_budget = max(1 << 20, vmem_cap // 10)      # ~6 MiB (v7x, 64 MiB) / ~12 MiB (v5e/v6e)

    w1 = w1.astype(jnp.float32)
    w2 = w2.astype(jnp.float32)
    kernel_kw = dict(k=k, dilation=dilation, pad=pad, true_hw=float(HW))

    slab_bytes = C * _round_up(HW, 128) * itemsize   # one batch's (C, HW_pad) slab
    split = force_split or slab_bytes > block_budget

    if not split:
        # -------- fused path --------
        HW_pad = _round_up(HW, 128)                  # lane-dense stores (no masked vst)
        x2 = x.reshape(B, C, HW)
        if HW_pad != HW:
            x2 = jnp.pad(x2, ((0, 0), (0, 0), (0, HW_pad - HW)))  # zeros don't disturb the sum

        per_batch = C * HW_pad * itemsize
        Bb = max(1, min(B, block_budget // per_batch))
        target_steps = 4 if B >= 4 else min(B, 2)    # >= 2 grid steps per TensorCore on v7x
        Bb = max(1, min(Bb, B // max(target_steps, 1)))
        grid = (pl.cdiv(B, Bb),)

        # double-buffered in+out blocks + f32 headroom for the pooled cast / final multiply
        vmem_need = 4 * Bb * per_batch + Bb * C * HW_pad * 4 + (1 << 20)
        params = dict(dimension_semantics=("parallel",))
        if vmem_need > (16 << 20):
            params["vmem_limit_bytes"] = int(min(vmem_need, vmem_cap_limit))

        cost = pl.CostEstimate(flops=3 * B * C * HW_pad,
                               transcendentals=B * C,
                               bytes_accessed=2 * B * C * HW_pad * itemsize)
        out = pl.pallas_call(
            functools.partial(_fused_kernel, **kernel_kw),
            out_shape=jax.ShapeDtypeStruct((B, C, HW_pad), x.dtype),
            grid=grid,
            in_specs=[
                pl.BlockSpec(memory_space=pltpu.MemorySpace.SMEM),   # w1: (k,) scalars
                pl.BlockSpec(memory_space=pltpu.MemorySpace.SMEM),   # w2: (k,) scalars
                pl.BlockSpec((Bb, C, HW_pad), lambda b: (b, 0, 0)),  # x slab
            ],
            out_specs=pl.BlockSpec((Bb, C, HW_pad), lambda b: (b, 0, 0)),
            compiler_params=pltpu.CompilerParams(**params),
            cost_estimate=cost,
        )(w1, w2, x2)
        return out[:, :, :HW].reshape(B, C, H, W)

    # -------- two-kernel split path (large HW slabs, or forced for testing) --------
    if hw_tile is None:
        THW = max(128, (block_budget // max(C * itemsize, 1)) // 128 * 128)
    else:
        THW = max(128, _round_up(int(hw_tile), 128))
    THW = min(THW, _round_up(HW, 128))
    HW_pad = _round_up(HW, THW)                      # every HW tile full & lane-dense (zero pad)
    x2 = x.reshape(B, C, HW)
    if HW_pad != HW:
        x2 = jnp.pad(x2, ((0, 0), (0, 0), (0, HW_pad - HW)))
    n_hw = HW_pad // THW

    tile_bytes = C * THW * itemsize
    vmem_need = 4 * tile_bytes + C * THW * 4 + (1 << 20)
    limit_params = {}
    if vmem_need > (16 << 20):
        limit_params["vmem_limit_bytes"] = int(min(vmem_need, vmem_cap_limit))

    # Kernel 1: HW-tiled global-average-pool + channel conv + sigmoid -> scale = 1 + s (f32, (B,C))
    scale = pl.pallas_call(
        functools.partial(_pool_scale_kernel, **kernel_kw),
        out_shape=jax.ShapeDtypeStruct((B, C), jnp.float32),
        grid=(B, n_hw),
        in_specs=[
            pl.BlockSpec(memory_space=pltpu.MemorySpace.SMEM),
            pl.BlockSpec(memory_space=pltpu.MemorySpace.SMEM),
            pl.BlockSpec((1, C, THW), lambda b, h: (b, 0, h)),
        ],
        out_specs=pl.BlockSpec((1, C), lambda b, h: (b, 0)),
        scratch_shapes=[pltpu.VMEM((1, C), jnp.float32)],
        compiler_params=pltpu.CompilerParams(
            dimension_semantics=("parallel", "arbitrary"), **limit_params),
        cost_estimate=pl.CostEstimate(flops=B * C * HW_pad,
                                      transcendentals=B * C,
                                      bytes_accessed=B * C * HW_pad * itemsize + B * C * 4),
    )(w1, w2, x2)

    # Kernel 2: HW-tiled residual scaling: out = x * (1 + s)
    out = pl.pallas_call(
        _apply_scale_kernel,
        out_shape=jax.ShapeDtypeStruct((B, C, HW_pad), x.dtype),
        grid=(B, n_hw),
        in_specs=[
            pl.BlockSpec((1, C), lambda b, h: (b, 0)),
            pl.BlockSpec((1, C, THW), lambda b, h: (b, 0, h)),
        ],
        out_specs=pl.BlockSpec((1, C, THW), lambda b, h: (b, 0, h)),
        compiler_params=pltpu.CompilerParams(
            dimension_semantics=("parallel", "parallel"), **limit_params),
        cost_estimate=pl.CostEstimate(flops=2 * B * C * HW_pad,
                                      transcendentals=0,
                                      bytes_accessed=2 * B * C * HW_pad * itemsize),
    )(scale, x2)
    return out[:, :, :HW].reshape(B, C, H, W)


def channel_attention_ref(x, w1, w2, dilation, pad):
    """Pure-JAX reference of the PyTorch forward (for verification)."""
    B, C, H, W = x.shape
    k = w1.shape[0]
    y = jnp.mean(x.astype(jnp.float32), axis=(2, 3))                 # (B, C)

    def conv1d(v, w):
        vp = jnp.pad(v, ((0, 0), (pad, pad)))
        out = jnp.zeros_like(v)
        for j in range(k):
            out = out + w[j] * vp[:, j * dilation: j * dilation + C]
        return out

    z = conv1d(y, w1)
    z = conv1d(jnp.maximum(z, 0.0), w2)
    s = jax.nn.sigmoid(z)[:, :, None, None]
    return x + x * s.astype(x.dtype)


if __name__ == "__main__":
    def _run_case(B, C, H, W, dtype, **kw):
        k, r, pad = _aaca_hparams(C)
        key = jax.random.PRNGKey(0)
        kx, k1, k2 = jax.random.split(key, 3)
        x = jax.random.normal(kx, (B, C, H, W), dtype=jnp.float32).astype(dtype)
        # Conv1d weight (PyTorch (1,1,k) -> (k,)), uniform(-1/sqrt(k), 1/sqrt(k)), bias=False.
        bound = 1.0 / math.sqrt(max(k, 1))
        w1 = jax.random.uniform(k1, (k,), minval=-bound, maxval=bound, dtype=jnp.float32)
        w2 = jax.random.uniform(k2, (k,), minval=-bound, maxval=bound, dtype=jnp.float32)

        out = jax.block_until_ready(channel_attention_pallas(x, w1, w2, r, pad, **kw))
        ref = channel_attention_ref(x.astype(jnp.float32), w1, w2, r, pad)
        tol = 1e-5 if dtype == jnp.float32 else 2e-2
        np.testing.assert_allclose(np.asarray(out, dtype=np.float32), np.asarray(ref),
                                   rtol=tol, atol=tol)

    # Fused single-kernel path: lane-native HW (16*16 = 256), non-trivial k=3, r=2 conv at C=128.
    _run_case(2, 128, 16, 16, jnp.float32)
    # HW not a multiple of 128 (14*14 = 196): exercises zero-padded lane-dense stores.
    _run_case(3, 128, 14, 14, jnp.float32)
    # Force the two-kernel (pool+conv+sigmoid, then scale) split path used for large spatial slabs.
    _run_case(2, 128, 16, 16, jnp.float32, force_split=True, hw_tile=128)

    print("KERNEL_OK")
</pallas_src>

<mosaic_0001>
module attributes {stable_mosaic.version = 11 : i64} {
  func.func @_fused_kernel(%arg0: i32, %arg1: memref<3xf32, #tpu.memory_space<smem>>, %arg2: memref<3xf32, #tpu.memory_space<smem>>, %arg3: memref<1x128x256xf32, #tpu.memory_space<vmem>>, %arg4: memref<1x128x256xf32, #tpu.memory_space<vmem>>) attributes {dimension_semantics = [#tpu.dimension_semantics<parallel>], iteration_bounds = array<i64: 2>, scalar_prefetch = 0 : i64, scratch_operands = 0 : i64, tpu.core_type = #tpu.core_type<tc>, window_params = [{transform_indices = @transform_0, window_bounds = array<i64: 3>}, {transform_indices = @transform_1, window_bounds = array<i64: 3>}, {transform_indices = @transform_2, window_bounds = array<i64: 1, 128, 256>}, {transform_indices = @transform_3, window_bounds = array<i64: 1, 128, 256>}]} {
    %c0 = arith.constant 0 : index
    %c0_0 = arith.constant 0 : index
    %c0_1 = arith.constant 0 : index
    %0 = vector.load %arg3[%c0, %c0_0, %c0_1] : memref<1x128x256xf32, #tpu.memory_space<vmem>>, vector<1x128x256xf32>
    %cst = arith.constant dense<0.000000e+00> : vector<1x128xf32>
    %1 = vector.multi_reduction <add>, %0, %cst [2] : vector<1x128x256xf32> to vector<1x128xf32>
    %cst_2 = arith.constant 3.906250e-03 : f32
    %2 = vector.broadcast %cst_2 : f32 to vector<1x128xf32>
    %3 = arith.mulf %1, %2 : vector<1x128xf32>
    %4 = tpu.iota {dimensions = array<i32: 1>} : vector<1x128xi32>
    %cst_3 = arith.constant 0.000000e+00 : f32
    %5 = vector.broadcast %cst_3 : f32 to vector<1x128xf32>
    %c2_i32 = arith.constant 2 : i32
    %6 = tpu.dynamic_rotate %3 by %c2_i32 dim 1 : vector<1x128xf32>, i32 -> vector<1x128xf32>
    %c-2_i32 = arith.constant -2 : i32
    %7 = vector.broadcast %c-2_i32 : i32 to vector<1x128xi32>
    %8 = arith.addi %4, %7 : vector<1x128xi32>
    %c0_i32 = arith.constant 0 : i32
    %9 = vector.broadcast %c0_i32 : i32 to vector<1x128xi32>
    %10 = arith.cmpi sge, %8, %9 : vector<1x128xi32>
    %c128_i32 = arith.constant 128 : i32
    %11 = vector.broadcast %c128_i32 : i32 to vector<1x128xi32>
    %12 = arith.cmpi slt, %8, %11 : vector<1x128xi32>
    %13 = arith.andi %10, %12 : vector<1x128xi1>
    %cst_4 = arith.constant 0.000000e+00 : f32
    %14 = vector.broadcast %cst_4 : f32 to vector<1x128xf32>
    %15 = arith.select %13, %6, %14 : vector<1x128xi1>, vector<1x128xf32>
    %c0_5 = arith.constant 0 : index
    %16 = memref.load %arg1[%c0_5] : memref<3xf32, #tpu.memory_space<smem>>
    %17 = vector.broadcast %16 : f32 to vector<1x128xf32>
    %18 = arith.mulf %17, %15 : vector<1x128xf32>
    %19 = arith.addf %5, %18 : vector<1x128xf32>
    %c1 = arith.constant 1 : index
    %20 = memref.load %arg1[%c1] : memref<3xf32, #tpu.memory_space<smem>>
    %21 = vector.broadcast %20 : f32 to vector<1x128xf32>
    %22 = arith.mulf %21, %3 : vector<1x128xf32>
    %23 = arith.addf %19, %22 : vector<1x128xf32>
    %c126_i32 = arith.constant 126 : i32
    %24 = tpu.dynamic_rotate %3 by %c126_i32 dim 1 : vector<1x128xf32>, i32 -> vector<1x128xf32>
    %c2_i32_6 = arith.constant 2 : i32
    %25 = vector.broadcast %c2_i32_6 : i32 to vector<1x128xi32>
    %26 = arith.addi %4, %25 : vector<1x128xi32>
    %c0_i32_7 = arith.constant 0 : i32
    %27 = vector.broadcast %c0_i32_7 : i32 to vector<1x128xi32>
    %28 = arith.cmpi sge, %26, %27 : vector<1x128xi32>
    %c128_i32_8 = arith.constant 128 : i32
    %29 = vector.broadcast %c128_i32_8 : i32 to vector<1x128xi32>
    %30 = arith.cmpi slt, %26, %29 : vector<1x128xi32>
    %31 = arith.andi %28, %30 : vector<1x128xi1>
    %cst_9 = arith.constant 0.000000e+00 : f32
    %32 = vector.broadcast %cst_9 : f32 to vector<1x128xf32>
    %33 = arith.select %31, %24, %32 : vector<1x128xi1>, vector<1x128xf32>
    %c2 = arith.constant 2 : index
    %34 = memref.load %arg1[%c2] : memref<3xf32, #tpu.memory_space<smem>>
    %35 = vector.broadcast %34 : f32 to vector<1x128xf32>
    %36 = arith.mulf %35, %33 : vector<1x128xf32>
    %37 = arith.addf %23, %36 : vector<1x128xf32>
    %cst_10 = arith.constant 0.000000e+00 : f32
    %38 = vector.broadcast %cst_10 : f32 to vector<1x128xf32>
    %39 = arith.maximumf %37, %38 : vector<1x128xf32>
    %40 = tpu.iota {dimensions = array<i32: 1>} : vector<1x128xi32>
    %cst_11 = arith.constant 0.000000e+00 : f32
    %41 = vector.broadcast %cst_11 : f32 to vector<1x128xf32>
    %c2_i32_12 = arith.constant 2 : i32
    %42 = tpu.dynamic_rotate %39 by %c2_i32_12 dim 1 : vector<1x128xf32>, i32 -> vector<1x128xf32>
    %c-2_i32_13 = arith.constant -2 : i32
    %43 = vector.broadcast %c-2_i32_13 : i32 to vector<1x128xi32>
    %44 = arith.addi %40, %43 : vector<1x128xi32>
    %c0_i32_14 = arith.constant 0 : i32
    %45 = vector.broadcast %c0_i32_14 : i32 to vector<1x128xi32>
    %46 = arith.cmpi sge, %44, %45 : vector<1x128xi32>
    %c128_i32_15 = arith.constant 128 : i32
    %47 = vector.broadcast %c128_i32_15 : i32 to vector<1x128xi32>
    %48 = arith.cmpi slt, %44, %47 : vector<1x128xi32>
    %49 = arith.andi %46, %48 : vector<1x128xi1>
    %cst_16 = arith.constant 0.000000e+00 : f32
    %50 = vector.broadcast %cst_16 : f32 to vector<1x128xf32>
    %51 = arith.select %49, %42, %50 : vector<1x128xi1>, vector<1x128xf32>
    %c0_17 = arith.constant 0 : index
    %52 = memref.load %arg2[%c0_17] : memref<3xf32, #tpu.memory_space<smem>>
    %53 = vector.broadcast %52 : f32 to vector<1x128xf32>
    %54 = arith.mulf %53, %51 : vector<1x128xf32>
    %55 = arith.addf %41, %54 : vector<1x128xf32>
    %c1_18 = arith.constant 1 : index
    %56 = memref.load %arg2[%c1_18] : memref<3xf32, #tpu.memory_space<smem>>
    %57 = vector.broadcast %56 : f32 to vector<1x128xf32>
    %58 = arith.mulf %57, %39 : vector<1x128xf32>
    %59 = arith.addf %55, %58 : vector<1x128xf32>
    %c126_i32_19 = arith.constant 126 : i32
    %60 = tpu.dynamic_rotate %39 by %c126_i32_19 dim 1 : vector<1x128xf32>, i32 -> vector<1x128xf32>
    %c2_i32_20 = arith.constant 2 : i32
    %61 = vector.broadcast %c2_i32_20 : i32 to vector<1x128xi32>
    %62 = arith.addi %40, %61 : vector<1x128xi32>
    %c0_i32_21 = arith.constant 0 : i32
    %63 = vector.broadcast %c0_i32_21 : i32 to vector<1x128xi32>
    %64 = arith.cmpi sge, %62, %63 : vector<1x128xi32>
    %c128_i32_22 = arith.constant 128 : i32
    %65 = vector.broadcast %c128_i32_22 : i32 to vector<1x128xi32>
    %66 = arith.cmpi slt, %62, %65 : vector<1x128xi32>
    %67 = arith.andi %64, %66 : vector<1x128xi1>
    %cst_23 = arith.constant 0.000000e+00 : f32
    %68 = vector.broadcast %cst_23 : f32 to vector<1x128xf32>
    %69 = arith.select %67, %60, %68 : vector<1x128xi1>, vector<1x128xf32>
    %c2_24 = arith.constant 2 : index
    %70 = memref.load %arg2[%c2_24] : memref<3xf32, #tpu.memory_space<smem>>
    %71 = vector.broadcast %70 : f32 to vector<1x128xf32>
    %72 = arith.mulf %71, %69 : vector<1x128xf32>
    %73 = arith.addf %59, %72 : vector<1x128xf32>
    %74 = arith.negf %73 : vector<1x128xf32>
    %75 = math.exp %74 : vector<1x128xf32>
    %cst_25 = arith.constant 1.000000e+00 : f32
    %76 = vector.broadcast %cst_25 : f32 to vector<1x128xf32>
    %77 = arith.addf %76, %75 : vector<1x128xf32>
    %78 = arith.divf %76, %77 : vector<1x128xf32>
    %cst_26 = arith.constant 1.000000e+00 : f32
    %79 = vector.broadcast %cst_26 : f32 to vector<1x128xf32>
    %80 = arith.addf %79, %78 : vector<1x128xf32>
    %c0_27 = arith.constant 0 : index
    %c0_28 = arith.constant 0 : index
    %c0_29 = arith.constant 0 : index
    %81 = vector.load %arg3[%c0_27, %c0_28, %c0_29] : memref<1x128x256xf32, #tpu.memory_space<vmem>>, vector<1x128x256xf32>
    %82 = vector.shape_cast %80 : vector<1x128xf32> to vector<1x128x1xf32>
    %83 = vector.broadcast %82 : vector<1x128x1xf32> to vector<1x128x256xf32>
    %84 = arith.mulf %81, %83 : vector<1x128x256xf32>
    %c0_30 = arith.constant 0 : index
    %c0_31 = arith.constant 0 : index
    %c0_32 = arith.constant 0 : index
    %85 = vector.load %arg4[%c0_30, %c0_31, %c0_32] : memref<1x128x256xf32, #tpu.memory_space<vmem>>, vector<1x128x256xf32>
    tpu.vector_store %arg4[%c0_30, %c0_31, %c0_32], %84 {strides = array<i32>} : memref<1x128x256xf32, #tpu.memory_space<vmem>>, vector<1x128x256xf32>,
    return
  }
  func.func @transform_0(%arg0: i32) -> i32 {
    %c0_i32 = arith.constant 0 : i32
    %c0_i32_0 = arith.constant 0 : i32
    return %c0_i32 : i32
  }
  func.func @transform_1(%arg0: i32) -> i32 {
    %c0_i32 = arith.constant 0 : i32
    %c0_i32_0 = arith.constant 0 : i32
    return %c0_i32 : i32
  }
  func.func @transform_2(%arg0: i32) -> (i32, i32, i32) {
    %c0_i32 = arith.constant 0 : i32
    %c0_i32_0 = arith.constant 0 : i32
    %c0_i32_1 = arith.constant 0 : i32
    return %arg0, %c0_i32, %c0_i32_0 : i32, i32, i32
  }
  func.func @transform_3(%arg0: i32) -> (i32, i32, i32) {
    %c0_i32 = arith.constant 0 : i32
    %c0_i32_0 = arith.constant 0 : i32
    %c0_i32_1 = arith.constant 0 : i32
    return %arg0, %c0_i32, %c0_i32_0 : i32, i32, i32
  }
}

</mosaic_0001>

<llo_original>
// kernel: tpu_custom_call.1
$region0: #{tpu_custom_call.1}
  #allocation0 [shape = 'u32[]', space=smem, size = 0x4, offset = 0x4, fixed_abs, tag = 'smem constant byte address 0x4 - core index']
  #allocation1 [shape = 'u32[144,128]{1,0:T(1,128)}', space=vmem, size = 0x12000, scoped, tag = 'internal scratch']
  %s0 = inlined_call_operand.hbm [shape: f32[3], index: 0, kind: input, shape index: {}]
  %s1 = inlined_call_operand.vmem [shape: f32[3], index: 1, kind: input, shape index: {}]
  %s2 = inlined_call_operand.hbm [shape: f32[2,128,256], index: 2, kind: input, shape index: {}]
  %s3 = inlined_call_operand.hbm [shape: f32[2,128,256], index: 3, kind: output, shape index: {}]
  %s4 = sld [smem:[#allocation0]]
  $region57: #{tpu_custom_call.1} parent=0
    _
  %s6 = ssub.s32 1, %s4
  %s7 = scalar_select 0, %s6, %s4
  $region1: #{tpu_custom_call.1} parent=0
    #allocation2 [shape = 'u8[512]{0}', space=smem, size = 0x200, scoped, tag = 'input window, operand 0, single buffered']
    #allocation3 [shape = 's32[2]{0}', space=sflag, size = 0x8, scoped, tag = 'scoped memory for tpu_custom_call.1']
    #allocation4 [shape = 's32[2]{0}', space=sflag, size = 0x8, scoped, tag = 'scoped memory for tpu_custom_call.1']
    #allocation5 [shape = 's32[2]{0}', space=sflag, size = 0x8, scoped, tag = 'scoped memory for tpu_custom_call.1']
    #allocation6 [shape = 's32[2]{0}', space=sflag, size = 0x8, scoped, tag = 'scoped memory for tpu_custom_call.1']
    #allocation7 [shape = 'u8[512]{0}', space=smem, size = 0x200, scoped, tag = 'input window, operand 1, single buffered']
    #allocation8 [shape = 'u8[262144]{0}', space=vmem, size = 0x40000, scoped, tag = 'input window, operand 2']
    #allocation9 [shape = 'u8[262144]{0}', space=vmem, size = 0x40000, scoped, tag = 'output window, operand 0']
    %8 = vsyncpa [#allocation5], 0
    %9 = vsyncpa [#allocation6], 0
    %10 = vsyncpa [#allocation3], 0
    %s11 = scalar_lea.sflag [#allocation3], 1
    %12 = vsyncpa %s11, 0
    %13 = vsyncpa [#allocation4], 0
    %s14 = scalar_lea.sflag [#allocation4], 1
    %15 = vsyncpa %s14, 0
    loop: start=0, step=1, limit=4
    $region2: #{tpu_custom_call.1} parent=1 // loop_pre_header
      _
    $region3: #{tpu_custom_call.1} parent=1 // loop_header
      %s17 = sphi 0, %s21
      %p18 = scmp.ge.s32.totalorder %s17, 4
      %s25 = sphi 0, %s25
      %s27 = sphi 0, %s25
      %s28 = sphi 0, %s27
      %s42 = sphi 0, %s28
      %s46 = sphi 0, %s46
      %s48 = sphi 0, %s46
      %s49 = sphi 0, %s48
      %s63 = sphi 0, %s49
      %s69 = sphi 0, %s71
      %s72 = sphi 0, %s69
      %s73 = sphi 0, %s72
      %s89 = sphi 0, %s73
      %s95 = sphi 0, %s97
      %s98 = sphi 0, %s95
      %s99 = sphi 0, %s98
      %s115 = sphi 0, %s99
    $region4: #{tpu_custom_call.1} parent=1 // loop_header_branch
      %20 = sbr.rel (%p18) target = $region8
    $region5: #{tpu_custom_call.1} parent=1 // loop_body
      %s22 = ssub.s32 %s17, 1
      %s23 = ssub.s32 %s17, 2
      %s24 = sadd.s32 %s17, 1
      %s26 = sadd.s32 %s25, 1
      %p29 = scmp.eq.s32.totalorder %s17, 1
      %p30 = scmp.ne.s32.totalorder %s25, %s27
      %p31 = scmp.eq.s32.totalorder %s17, 0
      %p32 = por %p30, %p31
      %p33 = scmp.ne.s32.totalorder %s25, %s27
      %p34 = scmp.eq.s32.totalorder %s22, 1
      %p35 = por %p33, %p34
      %p36 = scmp.ne.s32.totalorder %s27, %s28
      %p37 = scmp.eq.s32.totalorder %s22, 0
      %p38 = por %p36, %p37
      %p39 = scmp.ne.s32.totalorder %s27, %s28
      %p40 = scmp.eq.s32.totalorder %s23, 1
      %p41 = por %p39, %p40
      %p43 = scmp.ne.s32.totalorder %s28, %s42
      %p44 = scmp.eq.s32.totalorder %s23, 0
      %p45 = por %p43, %p44
      %s47 = sadd.s32 %s46, 1
      %p50 = scmp.eq.s32.totalorder %s17, 1
      %p51 = scmp.ne.s32.totalorder %s46, %s48
      %p52 = scmp.eq.s32.totalorder %s17, 0
      %p53 = por %p51, %p52
      %p54 = scmp.ne.s32.totalorder %s46, %s48
      %p55 = scmp.eq.s32.totalorder %s22, 1
      %p56 = por %p54, %p55
      %p57 = scmp.ne.s32.totalorder %s48, %s49
      %p58 = scmp.eq.s32.totalorder %s22, 0
      %p59 = por %p57, %p58
      %p60 = scmp.ne.s32.totalorder %s48, %s49
      %p61 = scmp.eq.s32.totalorder %s23, 1
      %p62 = por %p60, %p61
      %p64 = scmp.ne.s32.totalorder %s49, %s63
      %p65 = scmp.eq.s32.totalorder %s23, 0
      %p66 = por %p64, %p65
      %s67 = ssub.s32 %s17, %s24
      %p68 = scmp.eq.s32.totalorder %s67, 0
      %s70 = sadd.s32 %s69, 1
      %s71 = scalar_select %p68, %s69, %s70
      %p74 = pneg %p68
      %p75 = scmp.eq.s32.totalorder %s17, 1
      %p76 = por %p74, %p75
      %p77 = scmp.ne.s32.totalorder %s69, %s72
      %p78 = scmp.eq.s32.totalorder %s17, 0
      %p79 = por %p77, %p78
      %p80 = scmp.ne.s32.totalorder %s69, %s72
      %p81 = scmp.eq.s32.totalorder %s22, 1
      %p82 = por %p80, %p81
      %p83 = scmp.ne.s32.totalorder %s72, %s73
      %p84 = scmp.eq.s32.totalorder %s22, 0
      %p85 = por %p83, %p84
      %p86 = scmp.ne.s32.totalorder %s72, %s73
      %p87 = scmp.eq.s32.totalorder %s23, 1
      %p88 = por %p86, %p87
      %p90 = scmp.ne.s32.totalorder %s73, %s89
      %p91 = scmp.eq.s32.totalorder %s23, 0
      %p92 = por %p90, %p91
      %s93 = ssub.s32 %s17, %s24
      %p94 = scmp.eq.s32.totalorder %s93, 0
      %s96 = sadd.s32 %s95, 1
      %s97 = scalar_select %p94, %s95, %s96
      %p100 = pneg %p94
      %p101 = scmp.eq.s32.totalorder %s17, 1
      %p102 = por %p100, %p101
      %p103 = scmp.ne.s32.totalorder %s95, %s98
      %p104 = scmp.eq.s32.totalorder %s17, 0
      %p105 = por %p103, %p104
      %p106 = scmp.ne.s32.totalorder %s95, %s98
      %p107 = scmp.eq.s32.totalorder %s22, 1
      %p108 = por %p106, %p107
      %p109 = scmp.ne.s32.totalorder %s98, %s99
      %p110 = scmp.eq.s32.totalorder %s22, 0
      %p111 = por %p109, %p110
      %p112 = scmp.ne.s32.totalorder %s98, %s99
      %p113 = scmp.eq.s32.totalorder %s23, 1
      %p114 = por %p112, %p113
      %p116 = scmp.ne.s32.totalorder %s99, %s115
      %p117 = scmp.eq.s32.totalorder %s23, 0
      %p118 = por %p116, %p117
      %p119 = scmp.le.s32.totalorder 1, %s17
      %p120 = scmp.lt.s32.totalorder %s17, 3
      %p121 = pnand %p119, %p120
      %p122 = pneg %p121
      // Predicated region
      $region9: #{tpu_custom_call.1} parent=5 // pred_check
        _
      $region10: #{tpu_custom_call.1} parent=5 // pred_check_branch
        %124 = sbr.rel (%p121) target = $region12
      $region11: #{tpu_custom_call.1} parent=5 // pred_region
        %s125 = ssub.s32 %s17, 1
        // Predicated region
        $region13: #{tpu_custom_call.1} parent=11 // pred_check
          %p126 = pneg %p38
        $region14: #{tpu_custom_call.1} parent=11 // pred_check_branch
          %128 = sbr.rel (%p126) target = $region16
        $region15: #{tpu_custom_call.1} parent=11 // pred_region
          %s130 = ssub.s32 16, 16
          %131 = vsyncadd [#allocation5], %s130
          %134 = dma.hbm_to_smem %s0, 16, [#allocation2], [#allocation5]
        $region16: #{tpu_custom_call.1} parent=11 // pred_fallthru
          _
        // Predicated region
        $region17: #{tpu_custom_call.1} parent=11 // pred_check
          %p135 = pneg %p59
        $region18: #{tpu_custom_call.1} parent=11 // pred_check_branch
          %137 = sbr.rel (%p135) target = $region20
        $region19: #{tpu_custom_call.1} parent=11 // pred_region
          %s139 = ssub.s32 16, 16
          %140 = vsyncadd [#allocation6], %s139
          %s142 = sshll.u32 %s1, 4
          %s143 = int_to_ptr.vmem [resolvable:$true] %s142
          %145 = dma.vmem_to_smem %s143, 16, [#allocation7], [#allocation6]
        $region20: #{tpu_custom_call.1} parent=11 // pred_fallthru
          _
      $region12: #{tpu_custom_call.1} parent=5 // pred_fallthru
        _
      %p146 = scmp.lt.s32.totalorder %s17, 2
      // Predicated region
      $region21: #{tpu_custom_call.1} parent=5 // pred_check
        %p147 = pneg %p146
      $region22: #{tpu_custom_call.1} parent=5 // pred_check_branch
        %149 = sbr.rel (%p147) target = $region24
      $region23: #{tpu_custom_call.1} parent=5 // pred_region
        // Predicated region
        $region25: #{tpu_custom_call.1} parent=23 // pred_check
          %p150 = pneg %p79
        $region26: #{tpu_custom_call.1} parent=23 // pred_check_branch
          %152 = sbr.rel (%p150) target = $region28
        $region27: #{tpu_custom_call.1} parent=23 // pred_region
          %s153 = sand.u32 %s69, 1
          %s154 = scalar_lea.sflag [#allocation3], %s153
          %s155 = sand.u32 %s69, 1
          %s156 = smul.addr %s155, 256
          %s157 = scalar_lea.vmem [#allocation8], %s156
          %s159 = ssub.s32 4096, 4096
          %160 = vsyncadd %s154, %s159
          %s161 = smul.addr %s17, 32
          %s162 = smul.addr %s161, 128
          %s163 = scalar_lea.hbm %s2, %s162
          %s164 = sshll.u32 %s157, 4
          %s165 = int_to_ptr.vmem [resolvable:$true] %s164
          %170 = dma.hbm_to_vmem [thread:$0]  %s163, 4096, %s165, %s154, 256, 256, 16
        $region28: #{tpu_custom_call.1} parent=23 // pred_fallthru
          _
      $region24: #{tpu_custom_call.1} parent=5 // pred_fallthru
        _
      %p171 = scmp.le.s32.totalorder 1, %s17
      %p172 = scmp.lt.s32.totalorder %s17, 3
      %p173 = pnand %p171, %p172
      %p174 = pneg %p173
      // Predicated region
      $region29: #{tpu_custom_call.1} parent=5 // pred_check
        _
      $region30: #{tpu_custom_call.1} parent=5 // pred_check_branch
        %176 = sbr.rel (%p173) target = $region32
      $region31: #{tpu_custom_call.1} parent=5 // pred_region
        %s177 = ssub.s32 %s17, 1
        // Predicated region
        $region33: #{tpu_custom_call.1} parent=31 // pred_check
          %p178 = pneg %p38
        $region34: #{tpu_custom_call.1} parent=31 // pred_check_branch
          %180 = sbr.rel (%p178) target = $region36
        $region35: #{tpu_custom_call.1} parent=31 // pred_region
          %181 = dma.done [#allocation5], 16
        $region36: #{tpu_custom_call.1} parent=31 // pred_fallthru
          _
        // Predicated region
        $region37: #{tpu_custom_call.1} parent=31 // pred_check
          %p182 = pneg %p59
        $region38: #{tpu_custom_call.1} parent=31 // pred_check_branch
          %184 = sbr.rel (%p182) target = $region40
        $region39: #{tpu_custom_call.1} parent=31 // pred_region
          %185 = dma.done [#allocation6], 16
        $region40: #{tpu_custom_call.1} parent=31 // pred_fallthru
          _
        %s186 = sand.u32 %s72, 1
        %s187 = scalar_lea.sflag [#allocation3], %s186
        %s188 = sand.u32 %s72, 1
        %s189 = smul.addr %s188, 256
        %s190 = scalar_lea.vmem [#allocation8], %s189
        // Predicated region
        $region41: #{tpu_custom_call.1} parent=31 // pred_check
          %p191 = pneg %p85
        $region42: #{tpu_custom_call.1} parent=31 // pred_check_branch
          %193 = sbr.rel (%p191) target = $region44
        $region43: #{tpu_custom_call.1} parent=31 // pred_region
          %194 = dma.done %s187, 4096
        $region44: #{tpu_custom_call.1} parent=31 // pred_fallthru
          _
        %195 = sfence
        %p196 = pneg %p38
        %p197 = pneg %p35
        %p198 = pneg %p59
        %p199 = pneg %p56
        %s200 = sand.u32 %s72, 1
        %s201 = scalar_lea.sflag [#allocation3], %s200
        %s202 = sand.u32 %s72, 1
        %s203 = smul.addr %s202, 256
        %s204 = scalar_lea.vmem [#allocation8], %s203
        %p205 = pneg %p85
        %p206 = pneg %p82
        %p207 = pneg %p111
        %p208 = pneg %p108
        %s209 = sand.u32 %s98, 1
        %s210 = scalar_lea.sflag [#allocation4], %s209
        %s211 = sand.u32 %s98, 1
        %s212 = smul.addr %s211, 256
        %s213 = scalar_lea.vmem [#allocation9], %s212
        %v214 = vld [vmem:[%s190] sm:$0xff]
        %v215 = vld [vmem:[%s190 + $0x8] sm:$0xff]
        %v216 = vld [vmem:[%s190 + $0x10] sm:$0xff]
        %v217 = vld [vmem:[%s190 + $0x18] sm:$0xff]
        %v218 = vld [vmem:[%s190 + $0x20] sm:$0xff]
        %v219 = vld [vmem:[%s190 + $0x28] sm:$0xff]
        %v220 = vld [vmem:[%s190 + $0x30] sm:$0xff]
        %v221 = vld [vmem:[%s190 + $0x38] sm:$0xff]
        %v222 = vld [vmem:[%s190 + $0x40] sm:$0xff]
        %v223 = vld [vmem:[%s190 + $0x48] sm:$0xff]
        %v224 = vld [vmem:[%s190 + $0x50] sm:$0xff]
        %v225 = vld [vmem:[%s190 + $0x58] sm:$0xff]
        %v226 = vld [vmem:[%s190 + $0x60] sm:$0xff]
        %v227 = vld [vmem:[%s190 + $0x68] sm:$0xff]
        %v228 = vld [vmem:[%s190 + $0x70] sm:$0xff]
        %v229 = vld [vmem:[%s190 + $0x78] sm:$0xff]
        %v230 = vld [vmem:[%s190 + $0x80] sm:$0xff]
        %v231 = vld [vmem:[%s190 + $0x88] sm:$0xff]
        %v232 = vld [vmem:[%s190 + $0x90] sm:$0xff]
        %v233 = vld [vmem:[%s190 + $0x98] sm:$0xff]
        %v234 = vld [vmem:[%s190 + $0xa0] sm:$0xff]
        %v235 = vld [vmem:[%s190 + $0xa8] sm:$0xff]
        %v236 = vld [vmem:[%s190 + $0xb0] sm:$0xff]
        %v237 = vld [vmem:[%s190 + $0xb8] sm:$0xff]
        %v238 = vld [vmem:[%s190 + $0xc0] sm:$0xff]
        %v239 = vld [vmem:[%s190 + $0xc8] sm:$0xff]
        %v240 = vld [vmem:[%s190 + $0xd0] sm:$0xff]
        %v241 = vld [vmem:[%s190 + $0xd8] sm:$0xff]
        %v242 = vld [vmem:[%s190 + $0xe0] sm:$0xff]
        %v243 = vld [vmem:[%s190 + $0xe8] sm:$0xff]
        %v244 = vld [vmem:[%s190 + $0xf0] sm:$0xff]
        %v245 = vld [vmem:[%s190 + $0xf8] sm:$0xff]
        %v246 = vadd.f32 %v214, %v215
        %247 = vadd.xlane.f32.xlu0 %v246
        %v248 = vpop.xlane.xlu0 %247
        %v249 = vadd.f32 %v216, %v217
        %250 = vadd.xlane.f32.xlu0 %v249
        %v251 = vpop.xlane.xlu0 %250
        %v252 = vadd.f32 %v218, %v219
        %253 = vadd.xlane.f32.xlu0 %v252
        %v254 = vpop.xlane.xlu0 %253
        %v255 = vadd.f32 %v220, %v221
        %256 = vadd.xlane.f32.xlu0 %v255
        %v257 = vpop.xlane.xlu0 %256
        %v258 = vadd.f32 %v222, %v223
        %259 = vadd.xlane.f32.xlu0 %v258
        %v260 = vpop.xlane.xlu0 %259
        %v261 = vadd.f32 %v224, %v225
        %262 = vadd.xlane.f32.xlu0 %v261
        %v263 = vpop.xlane.xlu0 %262
        %v264 = vadd.f32 %v226, %v227
        %265 = vadd.xlane.f32.xlu0 %v264
        %v266 = vpop.xlane.xlu0 %265
        %v267 = vadd.f32 %v228, %v229
        %268 = vadd.xlane.f32.xlu0 %v267
        %v269 = vpop.xlane.xlu0 %268
        %v270 = vadd.f32 %v230, %v231
        %271 = vadd.xlane.f32.xlu0 %v270
        %v272 = vpop.xlane.xlu0 %271
        %v273 = vadd.f32 %v232, %v233
        %274 = vadd.xlane.f32.xlu0 %v273
        %v275 = vpop.xlane.xlu0 %274
        %v276 = vadd.f32 %v234, %v235
        %277 = vadd.xlane.f32.xlu0 %v276
        %v278 = vpop.xlane.xlu0 %277
        %v279 = vadd.f32 %v236, %v237
        %280 = vadd.xlane.f32.xlu0 %v279
        %v281 = vpop.xlane.xlu0 %280
        %v282 = vadd.f32 %v238, %v239
        %283 = vadd.xlane.f32.xlu0 %v282
        %v284 = vpop.xlane.xlu0 %283
        %v285 = vadd.f32 %v240, %v241
        %286 = vadd.xlane.f32.xlu0 %v285
        %v287 = vpop.xlane.xlu0 %286
        %v288 = vadd.f32 %v242, %v243
        %289 = vadd.xlane.f32.xlu0 %v288
        %v290 = vpop.xlane.xlu0 %289
        %v291 = vadd.f32 %v244, %v245
        %292 = vadd.xlane.f32.xlu0 %v291
        %v293 = vpop.xlane.xlu0 %292
        %v294 = vmul.f32 %v248, 0.00390625
        %v295 = vmul.f32 %v251, 0.00390625
        %v296 = vmul.f32 %v254, 0.00390625
        %v297 = vmul.f32 %v257, 0.00390625
        %v298 = vmul.f32 %v260, 0.00390625
        %v299 = vmul.f32 %v263, 0.00390625
        %v300 = vmul.f32 %v266, 0.00390625
        %v301 = vmul.f32 %v269, 0.00390625
        %v302 = vmul.f32 %v272, 0.00390625
        %v303 = vmul.f32 %v275, 0.00390625
        %v304 = vmul.f32 %v278, 0.00390625
        %v305 = vmul.f32 %v281, 0.00390625
        %v306 = vmul.f32 %v284, 0.00390625
        %v307 = vmul.f32 %v287, 0.00390625
        %v308 = vmul.f32 %v290, 0.00390625
        %v309 = vmul.f32 %v293, 0.00390625
        %v310 = vlaneseq
        %v311 = vand.u32 %v310, 127
        %v328 = vlaneseq
        %v329 = vshrl.u32 %v328, 7
        %v330 = vsub.s32 %v311, %v329
        %v331 = vrot.slane %v294, %v330
        %v332 = vadd.s32 %v311, 4294967288
        %v333 = vlaneseq
        %v334 = vshrl.u32 %v333, 7
        %v335 = vsub.s32 %v332, %v334
        %v336 = vrot.slane %v295, %v335
        %vm337 = vcmask 130112
        %v338 = vsel %vm337, %v336, %v331
        %v339 = vadd.s32 %v311, 4294967280
        %v340 = vlaneseq
        %v341 = vshrl.u32 %v340, 7
        %v342 = vsub.s32 %v339, %v341
        %v343 = vrot.slane %v296, %v342
        %vm344 = vcmask 195712
        %v345 = vsel %vm344, %v343, %v338
        %v346 = vadd.s32 %v311, 4294967272
        %v347 = vlaneseq
        %v348 = vshrl.u32 %v347, 7
        %v349 = vsub.s32 %v346, %v348
        %v350 = vrot.slane %v297, %v349
        %vm351 = vcmask 261312
        %v352 = vsel %vm351, %v350, %v345
        %v353 = vadd.s32 %v311, 4294967264
        %v354 = vlaneseq
        %v355 = vshrl.u32 %v354, 7
        %v356 = vsub.s32 %v353, %v355
        %v357 = vrot.slane %v298, %v356
        %vm358 = vcmask 326912
        %v359 = vsel %vm358, %v357, %v352
        %v360 = vadd.s32 %v311, 4294967256
        %v361 = vlaneseq
        %v362 = vshrl.u32 %v361, 7
        %v363 = vsub.s32 %v360, %v362
        %v364 = vrot.slane %v299, %v363
        %vm365 = vcmask 392512
        %v366 = vsel %vm365, %v364, %v359
        %v367 = vadd.s32 %v311, 4294967248
        %v368 = vlaneseq
        %v369 = vshrl.u32 %v368, 7
        %v370 = vsub.s32 %v367, %v369
        %v371 = vrot.slane %v300, %v370
        %vm372 = vcmask 458112
        %v373 = vsel %vm372, %v371, %v366
        %v374 = vadd.s32 %v311, 4294967240
        %v375 = vlaneseq
        %v376 = vshrl.u32 %v375, 7
        %v377 = vsub.s32 %v374, %v376
        %v378 = vrot.slane %v301, %v377
        %vm379 = vcmask 523712
        %v380 = vsel %vm379, %v378, %v373
        %v381 = vadd.s32 %v311, 4294967232
        %v382 = vlaneseq
        %v383 = vshrl.u32 %v382, 7
        %v384 = vsub.s32 %v381, %v383
        %v385 = vrot.slane %v302, %v384
        %vm386 = vcmask 589312
        %v387 = vsel %vm386, %v385, %v380
        %v388 = vadd.s32 %v311, 4294967224
        %v389 = vlaneseq
        %v390 = vshrl.u32 %v389, 7
        %v391 = vsub.s32 %v388, %v390
        %v392 = vrot.slane %v303, %v391
        %vm393 = vcmask 654912
        %v394 = vsel %vm393, %v392, %v387
        %v395 = vadd.s32 %v311, 4294967216
        %v396 = vlaneseq
        %v397 = vshrl.u32 %v396, 7
        %v398 = vsub.s32 %v395, %v397
        %v399 = vrot.slane %v304, %v398
        %vm400 = vcmask 720512
        %v401 = vsel %vm400, %v399, %v394
        %v402 = vadd.s32 %v311, 4294967208
        %v403 = vlaneseq
        %v404 = vshrl.u32 %v403, 7
        %v405 = vsub.s32 %v402, %v404
        %v406 = vrot.slane %v305, %v405
        %vm407 = vcmask 786112
        %v408 = vsel %vm407, %v406, %v401
        %v409 = vadd.s32 %v311, 4294967200
        %v410 = vlaneseq
        %v411 = vshrl.u32 %v410, 7
        %v412 = vsub.s32 %v409, %v411
        %v413 = vrot.slane %v306, %v412
        %vm414 = vcmask 851712
        %v415 = vsel %vm414, %v413, %v408
        %v416 = vadd.s32 %v311, 4294967192
        %v417 = vlaneseq
        %v418 = vshrl.u32 %v417, 7
        %v419 = vsub.s32 %v416, %v418
        %v420 = vrot.slane %v307, %v419
        %vm421 = vcmask 917312
        %v422 = vsel %vm421, %v420, %v415
        %v423 = vadd.s32 %v311, 4294967184
        %v424 = vlaneseq
        %v425 = vshrl.u32 %v424, 7
        %v426 = vsub.s32 %v423, %v425
        %v427 = vrot.slane %v308, %v426
        %vm428 = vcmask 982912
        %v429 = vsel %vm428, %v427, %v422
        %v430 = vadd.s32 %v311, 4294967176
        %v431 = vlaneseq
        %v432 = vshrl.u32 %v431, 7
        %v433 = vsub.s32 %v430, %v432
        %v434 = vrot.slane %v309, %v433
        %vm435 = vcmask 1048512
        %v436 = vsel %vm435, %v434, %v429
        %438 = vrot.lane.b32.xlu0 %v436, 2
        %v439 = vpop.permute.xlu0 %438
        %v440 = vadd.s32 %v311, 4294967294
        %vm441 = vcmp.ge.s32.totalorder %v440, 0
        %vm442 = vcmp.lt.s32.totalorder %v440, 128
        %vm443 = vmand %vm441, %vm442
        %v444 = vsel %vm443, %v439, 0.0
        %s445 = sld [smem:[#allocation2]]
        %v446 = vstv %s445
        %v447 = vmul.f32 %v446, %v444
        %v448 = vadd.f32 %v447, 0.0
        %s449 = sld [smem:[#allocation2 + $0x1]]
        %v450 = vstv %s449
        %v451 = vmul.f32 %v450, %v294
        %v452 = vmul.f32 %v450, %v295
        %v453 = vmul.f32 %v450, %v296
        %v454 = vmul.f32 %v450, %v297
        %v455 = vmul.f32 %v450, %v298
        %v456 = vmul.f32 %v450, %v299
        %v457 = vmul.f32 %v450, %v300
        %v458 = vmul.f32 %v450, %v301
        %v459 = vmul.f32 %v450, %v302
        %v460 = vmul.f32 %v450, %v303
        %v461 = vmul.f32 %v450, %v304
        %v462 = vmul.f32 %v450, %v305
        %v463 = vmul.f32 %v450, %v306
        %v464 = vmul.f32 %v450, %v307
        %v465 = vmul.f32 %v450, %v308
        %v466 = vmul.f32 %v450, %v309
        %v483 = vlaneseq
        %v484 = vshrl.u32 %v483, 7
        %v485 = vsub.s32 %v311, %v484
        %v486 = vrot.slane %v451, %v485
        %v487 = vlaneseq
        %v488 = vshrl.u32 %v487, 7
        %v489 = vsub.s32 %v332, %v488
        %v490 = vrot.slane %v452, %v489
        %v491 = vsel %vm337, %v490, %v486
        %v492 = vlaneseq
        %v493 = vshrl.u32 %v492, 7
        %v494 = vsub.s32 %v339, %v493
        %v495 = vrot.slane %v453, %v494
        %v496 = vsel %vm344, %v495, %v491
        %v497 = vlaneseq
        %v498 = vshrl.u32 %v497, 7
        %v499 = vsub.s32 %v346, %v498
        %v500 = vrot.slane %v454, %v499
        %v501 = vsel %vm351, %v500, %v496
        %v502 = vlaneseq
        %v503 = vshrl.u32 %v502, 7
        %v504 = vsub.s32 %v353, %v503
        %v505 = vrot.slane %v455, %v504
        %v506 = vsel %vm358, %v505, %v501
        %v507 = vlaneseq
        %v508 = vshrl.u32 %v507, 7
        %v509 = vsub.s32 %v360, %v508
        %v510 = vrot.slane %v456, %v509
        %v511 = vsel %vm365, %v510, %v506
        %v512 = vlaneseq
        %v513 = vshrl.u32 %v512, 7
        %v514 = vsub.s32 %v367, %v513
        %v515 = vrot.slane %v457, %v514
        %v516 = vsel %vm372, %v515, %v511
        %v517 = vlaneseq
        %v518 = vshrl.u32 %v517, 7
        %v519 = vsub.s32 %v374, %v518
        %v520 = vrot.slane %v458, %v519
        %v521 = vsel %vm379, %v520, %v516
        %v522 = vlaneseq
        %v523 = vshrl.u32 %v522, 7
        %v524 = vsub.s32 %v381, %v523
        %v525 = vrot.slane %v459, %v524
        %v526 = vsel %vm386, %v525, %v521
        %v527 = vlaneseq
        %v528 = vshrl.u32 %v527, 7
        %v529 = vsub.s32 %v388, %v528
        %v530 = vrot.slane %v460, %v529
        %v531 = vsel %vm393, %v530, %v526
        %v532 = vlaneseq
        %v533 = vshrl.u32 %v532, 7
        %v534 = vsub.s32 %v395, %v533
        %v535 = vrot.slane %v461, %v534
        %v536 = vsel %vm400, %v535, %v531
        %v537 = vlaneseq
        %v538 = vshrl.u32 %v537, 7
        %v539 = vsub.s32 %v402, %v538
        %v540 = vrot.slane %v462, %v539
        %v541 = vsel %vm407, %v540, %v536
        %v542 = vlaneseq
        %v543 = vshrl.u32 %v542, 7
        %v544 = vsub.s32 %v409, %v543
        %v545 = vrot.slane %v463, %v544
        %v546 = vsel %vm414, %v545, %v541
        %v547 = vlaneseq
        %v548 = vshrl.u32 %v547, 7
        %v549 = vsub.s32 %v416, %v548
        %v550 = vrot.slane %v464, %v549
        %v551 = vsel %vm421, %v550, %v546
        %v552 = vlaneseq
        %v553 = vshrl.u32 %v552, 7
        %v554 = vsub.s32 %v423, %v553
        %v555 = vrot.slane %v465, %v554
        %v556 = vsel %vm428, %v555, %v551
        %v557 = vlaneseq
        %v558 = vshrl.u32 %v557, 7
        %v559 = vsub.s32 %v430, %v558
        %v560 = vrot.slane %v466, %v559
        %v561 = vsel %vm435, %v560, %v556
        %v563 = vadd.f32 %v448, %v561
        %564 = vrot.lane.b32.xlu0 %v436, 126
        %v565 = vpop.permute.xlu0 %564
        %v566 = vadd.s32 %v311, 2
        %vm567 = vcmp.ge.s32.totalorder %v566, 0
        %vm568 = vcmp.lt.s32.totalorder %v566, 128
        %vm569 = vmand %vm567, %vm568
        %v570 = vsel %vm569, %v565, 0.0
        %s571 = sld [smem:[#allocation2 + $0x2]]
        %v572 = vstv %s571
        %v573 = vmul.f32 %v572, %v570
        %v574 = vadd.f32 %v563, %v573
        %v575 = vmax.f32 %v574, 0.0
        %576 = vrot.lane.b32.xlu0 %v575, 2
        %v577 = vpop.permute.xlu0 %576
        %v578 = vsel %vm443, %v577, 0.0
        %s579 = sld [smem:[#allocation7]]
        %v580 = vstv %s579
        %v581 = vmul.f32 %v580, %v578
        %v582 = vadd.f32 %v581, 0.0
        %s583 = sld [smem:[#allocation7 + $0x1]]
        %v584 = vstv %s583
        %v585 = vmul.f32 %v584, %v575
        %v586 = vadd.f32 %v582, %v585
        %587 = vrot.lane.b32.xlu0 %v575, 126
        %v588 = vpop.permute.xlu0 %587
        %v589 = vsel %vm569, %v588, 0.0
        %s590 = sld [smem:[#allocation7 + $0x2]]
        %v591 = vstv %s590
        %v592 = vmul.f32 %v591, %v589
        %v593 = vadd.f32 %v586, %v592
        %v594 = vxor.u32 %v593, 2147483648
        %v595 = vmul.f32 %v594, 1.442695
        %v596 = vpow.pop %v595
        %v597 = vadd.f32 %v596, 1.0
        %v598 = vrcp.pop %v597
        %v599 = vmul.f32 1.0, %v598
        %v600 = vadd.f32 %v599, 1.0
        %v601 = vlaneseq
        %v602 = vshrl.u32 %v601, 7
        %v603 = vsub.s32 0, %v602
        %v604 = vrot.slane %v600, %v603
        %606 = vbcast.lane.b32.xlu0 %v604, 256
        %v607 = vpop.permute.xlu0 %606
        %s609 = sor.u32 256, 8
        %610 = vbcast.lane.b32.xlu0 %v604, %s609
        %v611 = vpop.permute.xlu0 %610
        %s613 = sor.u32 256, 16
        %614 = vbcast.lane.b32.xlu0 %v604, %s613
        %v615 = vpop.permute.xlu0 %614
        %s617 = sor.u32 256, 24
        %618 = vbcast.lane.b32.xlu0 %v604, %s617
        %v619 = vpop.permute.xlu0 %618
        %s621 = sor.u32 256, 32
        %622 = vbcast.lane.b32.xlu0 %v604, %s621
        %v623 = vpop.permute.xlu0 %622
        %s625 = sor.u32 256, 40
        %626 = vbcast.lane.b32.xlu0 %v604, %s625
        %v627 = vpop.permute.xlu0 %626
        %s629 = sor.u32 256, 48
        %630 = vbcast.lane.b32.xlu0 %v604, %s629
        %v631 = vpop.permute.xlu0 %630
        %s633 = sor.u32 256, 56
        %634 = vbcast.lane.b32.xlu0 %v604, %s633
        %v635 = vpop.permute.xlu0 %634
        %s637 = sor.u32 256, 64
        %638 = vbcast.lane.b32.xlu0 %v604, %s637
        %v639 = vpop.permute.xlu0 %638
        %s641 = sor.u32 256, 72
        %642 = vbcast.lane.b32.xlu0 %v604, %s641
        %v643 = vpop.permute.xlu0 %642
        %s645 = sor.u32 256, 80
        %646 = vbcast.lane.b32.xlu0 %v604, %s645
        %v647 = vpop.permute.xlu0 %646
        %s649 = sor.u32 256, 88
        %650 = vbcast.lane.b32.xlu0 %v604, %s649
        %v651 = vpop.permute.xlu0 %650
        %s653 = sor.u32 256, 96
        %654 = vbcast.lane.b32.xlu0 %v604, %s653
        %v655 = vpop.permute.xlu0 %654
        %s657 = sor.u32 256, 104
        %658 = vbcast.lane.b32.xlu0 %v604, %s657
        %v659 = vpop.permute.xlu0 %658
        %s661 = sor.u32 256, 112
        %662 = vbcast.lane.b32.xlu0 %v604, %s661
        %v663 = vpop.permute.xlu0 %662
        %s665 = sor.u32 256, 120
        %666 = vbcast.lane.b32.xlu0 %v604, %s665
        %v667 = vpop.permute.xlu0 %666
        %v668 = vmul.f32 %v214, %v607
        %v669 = vmul.f32 %v215, %v607
        %v670 = vmul.f32 %v216, %v611
        %v671 = vmul.f32 %v217, %v611
        %v672 = vmul.f32 %v218, %v615
        %v673 = vmul.f32 %v219, %v615
        %v674 = vmul.f32 %v220, %v619
        %v675 = vmul.f32 %v221, %v619
        %v676 = vmul.f32 %v222, %v623
        %v677 = vmul.f32 %v223, %v623
        %v678 = vmul.f32 %v224, %v627
        %v679 = vmul.f32 %v225, %v627
        %v680 = vmul.f32 %v226, %v631
        %v681 = vmul.f32 %v227, %v631
        %v682 = vmul.f32 %v228, %v635
        %v683 = vmul.f32 %v229, %v635
        %v684 = vmul.f32 %v230, %v639
        %v685 = vmul.f32 %v231, %v639
        %v686 = vmul.f32 %v232, %v643
        %v687 = vmul.f32 %v233, %v643
        %v688 = vmul.f32 %v234, %v647
        %v689 = vmul.f32 %v235, %v647
        %v690 = vmul.f32 %v236, %v651
        %v691 = vmul.f32 %v237, %v651
        %v692 = vmul.f32 %v238, %v655
        %v693 = vmul.f32 %v239, %v655
        %v694 = vmul.f32 %v240, %v659
        %v695 = vmul.f32 %v241, %v659
        %v696 = vmul.f32 %v242, %v663
        %v697 = vmul.f32 %v243, %v663
        %v698 = vmul.f32 %v244, %v667
        %v699 = vmul.f32 %v245, %v667
        %700 = vst [vmem:[%s213] sm:$0xff] %v668
        %701 = vst [vmem:[%s213 + $0x8] sm:$0xff] %v669
        %702 = vst [vmem:[%s213 + $0x10] sm:$0xff] %v670
        %703 = vst [vmem:[%s213 + $0x18] sm:$0xff] %v671
        %704 = vst [vmem:[%s213 + $0x20] sm:$0xff] %v672
        %705 = vst [vmem:[%s213 + $0x28] sm:$0xff] %v673
        %706 = vst [vmem:[%s213 + $0x30] sm:$0xff] %v674
        %707 = vst [vmem:[%s213 + $0x38] sm:$0xff] %v675
        %708 = vst [vmem:[%s213 + $0x40] sm:$0xff] %v676
        %709 = vst [vmem:[%s213 + $0x48] sm:$0xff] %v677
        %710 = vst [vmem:[%s213 + $0x50] sm:$0xff] %v678
        %711 = vst [vmem:[%s213 + $0x58] sm:$0xff] %v679
        %712 = vst [vmem:[%s213 + $0x60] sm:$0xff] %v680
        %713 = vst [vmem:[%s213 + $0x68] sm:$0xff] %v681
        %714 = vst [vmem:[%s213 + $0x70] sm:$0xff] %v682
        %715 = vst [vmem:[%s213 + $0x78] sm:$0xff] %v683
        %716 = vst [vmem:[%s213 + $0x80] sm:$0xff] %v684
        %717 = vst [vmem:[%s213 + $0x88] sm:$0xff] %v685
        %718 = vst [vmem:[%s213 + $0x90] sm:$0xff] %v686
        %719 = vst [vmem:[%s213 + $0x98] sm:$0xff] %v687
        %720 = vst [vmem:[%s213 + $0xa0] sm:$0xff] %v688
        %721 = vst [vmem:[%s213 + $0xa8] sm:$0xff] %v689
        %722 = vst [vmem:[%s213 + $0xb0] sm:$0xff] %v690
        %723 = vst [vmem:[%s213 + $0xb8] sm:$0xff] %v691
        %724 = vst [vmem:[%s213 + $0xc0] sm:$0xff] %v692
        %725 = vst [vmem:[%s213 + $0xc8] sm:$0xff] %v693
        %726 = vst [vmem:[%s213 + $0xd0] sm:$0xff] %v694
        %727 = vst [vmem:[%s213 + $0xd8] sm:$0xff] %v695
        %728 = vst [vmem:[%s213 + $0xe0] sm:$0xff] %v696
        %729 = vst [vmem:[%s213 + $0xe8] sm:$0xff] %v697
        %730 = vst [vmem:[%s213 + $0xf0] sm:$0xff] %v698
        %731 = vst [vmem:[%s213 + $0xf8] sm:$0xff] %v699
        %s732 = sand.u32 %s98, 1
        %s733 = scalar_lea.sflag [#allocation4], %s732
        %s734 = sand.u32 %s98, 1
        %s735 = smul.addr %s734, 256
        %s736 = scalar_lea.vmem [#allocation9], %s735
        // Predicated region
        $region45: #{tpu_custom_call.1} parent=31 // pred_check
          %p737 = pneg %p108
        $region46: #{tpu_custom_call.1} parent=31 // pred_check_branch
          %739 = sbr.rel (%p737) target = $region48
        $region47: #{tpu_custom_call.1} parent=31 // pred_region
          %s741 = ssub.s32 4096, 4096
          %742 = vsyncadd %s733, %s741
          %s743 = smul.addr %s22, 32
          %s744 = smul.addr %s743, 128
          %s745 = scalar_lea.hbm %s3, %s744
          %s746 = sshll.u32 %s736, 4
          %s747 = int_to_ptr.vmem [resolvable:$true] %s746
          %752 = dma.vmem_to_hbm [thread:$0]  %s747, 4096, %s745, %s733, 256, 256, 16
        $region48: #{tpu_custom_call.1} parent=31 // pred_fallthru
          _
      $region32: #{tpu_custom_call.1} parent=5 // pred_fallthru
        _
      %p753 = scmp.le.s32.totalorder 2, %s17
      // Predicated region
      $region49: #{tpu_custom_call.1} parent=5 // pred_check
        %p754 = pneg %p753
      $region50: #{tpu_custom_call.1} parent=5 // pred_check_branch
        %756 = sbr.rel (%p754) target = $region52
      $region51: #{tpu_custom_call.1} parent=5 // pred_region
        %s757 = ssub.s32 %s17, 2
        // Predicated region
        $region53: #{tpu_custom_call.1} parent=51 // pred_check
          %p758 = pneg %p114
        $region54: #{tpu_custom_call.1} parent=51 // pred_check_branch
          %760 = sbr.rel (%p758) target = $region56
        $region55: #{tpu_custom_call.1} parent=51 // pred_region
          %s761 = sand.u32 %s99, 1
          %s762 = scalar_lea.sflag [#allocation4], %s761
          %s763 = sand.u32 %s99, 1
          %s764 = smul.addr %s763, 256
          %s765 = scalar_lea.vmem [#allocation9], %s764
          %766 = dma.done %s762, 4096
        $region56: #{tpu_custom_call.1} parent=51 // pred_fallthru
          _
      $region52: #{tpu_custom_call.1} parent=5 // pred_fallthru
        _
    $region6: #{tpu_custom_call.1} parent=1 // loop_footer
      %s21 = sadd.s32 1, %s17
    $region7: #{tpu_custom_call.1} parent=1 // loop_footer_branch
      %16 = sbr.rel target = $region3
    $region8: #{tpu_custom_call.1} parent=1 // loop_exit
      _
    %767 = vsyncpa [#allocation3], 1
    %s768 = scalar_lea.sflag [#allocation3], 1
    %769 = vsyncpa %s768, 1
    %770 = vsyncpa [#allocation4], 1
    %s771 = scalar_lea.sflag [#allocation4], 1
    %772 = vsyncpa %s771, 1
    %773 = vsyncpa [#allocation5], 1
    %s774 = scalar_lea.sflag [#allocation5], 1
    %775 = vsyncpa %s774, 1
    %776 = vsyncpa [#allocation6], 1
    %s777 = scalar_lea.sflag [#allocation6], 1
    %778 = vsyncpa %s777, 1

</llo_original>
